<compile_context>
chip_gen: v5e
topology: v5e:2x2
jax: 0.10.0
libtpu: 0.0.40
codegen_flags: <defaults>
</compile_context>

<pallas_src>
import jax
import jax.numpy as jnp
from jax import lax
from jax.experimental import pallas as pl
from jax.experimental.pallas import tpu as pltpu


def _round_up(v, m):
    return ((v + m - 1) // m) * m


def _linear_kernel(x_ref, w_ref, b_ref, o_ref):
    # x_ref : [tile_n, feat_dim]   (VMEM)
    # w_ref : [n_way, feat_dim]    (native nn.Linear layout)
    # b_ref : [1, n_way]
    # o_ref : [tile_n, n_way]
    acc = lax.dot_general(
        x_ref[...], w_ref[...],
        dimension_numbers=(((1,), (1,)), ((), ())),  # contract feat_dim on both
        preferred_element_type=jnp.float32,
    )
    o_ref[...] = (acc + b_ref[...].astype(jnp.float32)).astype(o_ref.dtype)


def ifsl_forward(x, weight, bias, *, tile_n=None, compute_dtype=None):
    """Pallas implementation of IFSLBaseLearner.forward (== F.linear).

    x:      [N, feat_dim]
    weight: [n_way, feat_dim]   (PyTorch nn.Linear layout, NOT transposed)
    bias:   [n_way]
    compute_dtype: optional cast for x/W (e.g. jnp.bfloat16) for large-N use;
                   accumulation stays float32, output stays x.dtype.
    returns scores: [N, n_way]
    """
    n, feat_dim = x.shape
    n_way = weight.shape[0]
    out_dtype = x.dtype

    if compute_dtype is not None:
        x = x.astype(compute_dtype)
        weight = weight.astype(compute_dtype)

    b2d = bias.reshape(1, n_way)  # zero-cost metadata reshape

    # Row-tile selection:
    #   - small N: one tile covering all rows (rounded to a sublane multiple of 8)
    #   - large N: cap at 1024 rows/tile and ensure >= 2 grid steps so the
    #     "parallel" grid axis can shard across TensorCores (v7x megacore).
    full_tile = _round_up(max(n, 8), 8)
    if tile_n is None:
        if n <= 1024:
            tile_n = full_tile
        else:
            tile_n = min(1024, _round_up(pl.cdiv(n, 2), 8))
    tile_n = _round_up(min(tile_n, full_tile), 8)

    grid = (pl.cdiv(n, tile_n),)

    cost = pl.CostEstimate(
        flops=2 * n * feat_dim * n_way,
        transcendentals=0,
        bytes_accessed=(n * feat_dim * jnp.dtype(x.dtype).itemsize
                        + n_way * feat_dim * jnp.dtype(weight.dtype).itemsize
                        + n_way * jnp.dtype(bias.dtype).itemsize
                        + n * n_way * jnp.dtype(out_dtype).itemsize),
    )

    return pl.pallas_call(
        _linear_kernel,
        out_shape=jax.ShapeDtypeStruct((n, n_way), out_dtype),
        grid_spec=pltpu.PrefetchScalarGridSpec(
            num_scalar_prefetch=0,
            grid=grid,
            in_specs=[
                pl.BlockSpec((tile_n, feat_dim), lambda i: (i, 0)),
                # W and b are revisited every grid step (index (0, 0)).
                pl.BlockSpec((n_way, feat_dim), lambda i: (0, 0)),
                pl.BlockSpec((1, n_way), lambda i: (0, 0)),
            ],
            out_specs=pl.BlockSpec((tile_n, n_way), lambda i: (i, 0)),
        ),
        compiler_params=pltpu.CompilerParams(
            dimension_semantics=("parallel",)),
        cost_estimate=cost,
    )(x, weight, b2d)


if __name__ == "__main__":
    # Module config (small, consistent with IFSLBaseLearner.__init__):
    feat_dim = 64
    n_way = 5
    batch = 8  # e.g. n_way * k_shot support examples

    key = jax.random.PRNGKey(0)
    kx, kw, kq = jax.random.split(key, 3)

    # nn.Linear-style init (uniform bound 1/sqrt(in_features)); bias zero-filled
    # as in IFSLBaseLearner.__init__.
    bound = 1.0 / (feat_dim ** 0.5)
    weight = jax.random.uniform(kw, (n_way, feat_dim), jnp.float32,
                                minval=-bound, maxval=bound)
    bias = jnp.zeros((n_way,), jnp.float32)

    x = jax.random.normal(kx, (batch, feat_dim), jnp.float32)

    scores = ifsl_forward(x, weight, bias)
    jax.block_until_ready(scores)

    ref = x @ weight.T + bias
    assert scores.shape == (batch, n_way)
    assert jnp.allclose(scores, ref, atol=1e-5, rtol=1e-5), "mismatch vs reference"

    # Query set with N not a multiple of 8 (single partial block, grid = 1).
    q = jax.random.normal(kq, (20, feat_dim), jnp.float32)
    scores_q = ifsl_forward(q, weight, bias)
    jax.block_until_ready(scores_q)
    ref_q = q @ weight.T + bias
    assert scores_q.shape == (20, n_way)
    assert jnp.allclose(scores_q, ref_q, atol=1e-5, rtol=1e-5), "mismatch (query) vs reference"

    # Multi-step grid with a partial tail tile (tile_n=8 over 20 rows -> grid 3).
    scores_t = ifsl_forward(q, weight, bias, tile_n=8)
    jax.block_until_ready(scores_t)
    assert scores_t.shape == (20, n_way)
    assert jnp.allclose(scores_t, ref_q, atol=1e-5, rtol=1e-5), "mismatch (tiled) vs reference"

    # TODO(synk): fit() (MAML-style inner-loop adaptation with CE loss + autograd)
    # is training logic, not part of forward(); not implemented as a kernel.
    print("KERNEL_OK")
</pallas_src>

<mosaic_0001>
module attributes {stable_mosaic.version = 11 : i64} {
  func.func @_linear_kernel(%arg0: i32, %arg1: memref<8x64xf32, #tpu.memory_space<vmem>>, %arg2: memref<5x64xf32, #tpu.memory_space<vmem>>, %arg3: memref<1x5xf32, #tpu.memory_space<vmem>>, %arg4: memref<8x5xf32, #tpu.memory_space<vmem>>) attributes {dimension_semantics = [#tpu.dimension_semantics<parallel>], iteration_bounds = array<i64: 1>, scalar_prefetch = 0 : i64, scratch_operands = 0 : i64, tpu.core_type = #tpu.core_type<tc>, window_params = [{transform_indices = @transform_0, window_bounds = array<i64: 8, 64>}, {pipeline_mode = #tpu.pipeline_mode<synchronous>, transform_indices = @transform_1, window_bounds = array<i64: 5, 64>}, {pipeline_mode = #tpu.pipeline_mode<synchronous>, transform_indices = @transform_2, window_bounds = array<i64: 1, 5>}, {transform_indices = @transform_3, window_bounds = array<i64: 8, 5>}]} {
    %c0 = arith.constant 0 : index
    %c0_0 = arith.constant 0 : index
    %0 = vector.load %arg1[%c0, %c0_0] : memref<8x64xf32, #tpu.memory_space<vmem>>, vector<8x64xf32>
    %c0_1 = arith.constant 0 : index
    %c0_2 = arith.constant 0 : index
    %1 = vector.load %arg2[%c0_1, %c0_2] : memref<5x64xf32, #tpu.memory_space<vmem>>, vector<5x64xf32>
    %cst = arith.constant dense<0.000000e+00> : vector<8x5xf32>
    %2 = tpu.matmul %0, %1, %cst {dimension_numbers = #tpu.dot_dimension_numbers<[1], [1], [0], [0], [0, 0, 1, 0], [], []>} : vector<8x64xf32>, vector<5x64xf32>, vector<8x5xf32> -> vector<8x5xf32>
    %c0_3 = arith.constant 0 : index
    %c0_4 = arith.constant 0 : index
    %3 = vector.load %arg3[%c0_3, %c0_4] : memref<1x5xf32, #tpu.memory_space<vmem>>, vector<1x5xf32>
    %4 = vector.broadcast %3 : vector<1x5xf32> to vector<8x5xf32>
    %5 = arith.addf %2, %4 : vector<8x5xf32>
    %c0_5 = arith.constant 0 : index
    %c0_6 = arith.constant 0 : index
    %6 = vector.load %arg4[%c0_5, %c0_6] : memref<8x5xf32, #tpu.memory_space<vmem>>, vector<8x5xf32>
    tpu.vector_store %arg4[%c0_5, %c0_6], %5 {strides = array<i32>} : memref<8x5xf32, #tpu.memory_space<vmem>>, vector<8x5xf32>,
    return
  }
  func.func @transform_0(%arg0: i32) -> (i32, i32) {
    %c0_i32 = arith.constant 0 : i32
    %c0_i32_0 = arith.constant 0 : i32
    return %arg0, %c0_i32 : i32, i32
  }
  func.func @transform_1(%arg0: i32) -> (i32, i32) {
    %c0_i32 = arith.constant 0 : i32
    %c0_i32_0 = arith.constant 0 : i32
    %c0_i32_1 = arith.constant 0 : i32
    return %c0_i32, %c0_i32_0 : i32, i32
  }
  func.func @transform_2(%arg0: i32) -> (i32, i32) {
    %c0_i32 = arith.constant 0 : i32
    %c0_i32_0 = arith.constant 0 : i32
    %c0_i32_1 = arith.constant 0 : i32
    return %c0_i32, %c0_i32_0 : i32, i32
  }
  func.func @transform_3(%arg0: i32) -> (i32, i32) {
    %c0_i32 = arith.constant 0 : i32
    %c0_i32_0 = arith.constant 0 : i32
    return %arg0, %c0_i32 : i32, i32
  }
}

</mosaic_0001>

<llo_original>
// kernel: tpu_custom_call.1
$region0: #{tpu_custom_call.1}
  #allocation0 [shape = 'u32[]', space=smem, size = 0x4, offset = 0x4, fixed_abs, tag = 'smem constant byte address 0x4 - core index']
  #allocation1 [shape = 'u32[72,128]{1,0:T(1,128)}', space=vmem, size = 0x9000, scoped, tag = 'internal scratch']
  %s0 = inlined_call_operand.hbm [shape: f32[8,64], index: 0, kind: input, shape index: {}]
  %s1 = inlined_call_operand.hbm [shape: f32[5,64], index: 1, kind: input, shape index: {}]
  %s2 = inlined_call_operand.vmem [shape: f32[1,5], index: 2, kind: input, shape index: {}]
  %s3 = inlined_call_operand.hbm [shape: f32[8,5], index: 3, kind: output, shape index: {}]
  %s4 = sld [smem:[#allocation0]]
  $region30: #{tpu_custom_call.1} parent=0
    _
  %s6 = ssub.s32 1, %s4
  %s7 = scalar_select 0, %s6, %s4
  $region1: #{tpu_custom_call.1} parent=0
    #allocation2 [shape = 'u8[4096]{0}', space=vmem, size = 0x1000, scoped, tag = 'input window, operand 0, single buffered']
    #allocation3 [shape = 's32[1]{0}', space=sflag, size = 0x4, scoped, tag = 'scoped memory for tpu_custom_call.1']
    #allocation4 [shape = 's32[1]{0}', space=sflag, size = 0x4, scoped, tag = 'scoped memory for tpu_custom_call.1']
    #allocation5 [shape = 'u8[4096]{0}', space=vmem, size = 0x1000, scoped, tag = 'input window, operand 1, single buffered']
    #allocation6 [shape = 's32[1]{0}', space=sflag, size = 0x4, scoped, tag = 'scoped memory for tpu_custom_call.1']
    #allocation7 [shape = 'u8[4096]{0}', space=vmem, size = 0x1000, scoped, tag = 'output window, operand 0, single buffered']
    %8 = vsyncpa [#allocation3], 0
    %9 = vsyncpa [#allocation6], 0
    %10 = vsyncpa [#allocation4], 0
    // Predicated region
    $region2: #{tpu_custom_call.1} parent=1 // pred_check
      _
    $region3: #{tpu_custom_call.1} parent=1 // pred_check_branch
      %12 = sbr.rel (0) target = $region5
    $region4: #{tpu_custom_call.1} parent=1 // pred_region
      %14 = vsyncadd [#allocation3], 0
      %s16 = sshll.u32 %s0, 4
      %s17 = int_to_ptr.hbm [resolvable:$true] %s16
      %s18 = sshll.u32 [#allocation2], 4
      %s19 = int_to_ptr.vmem [resolvable:$true] %s18
      %21 = dma.hbm_to_vmem [thread:$0]  %s17, 128, %s19, [#allocation3]
    $region5: #{tpu_custom_call.1} parent=1 // pred_fallthru
      _
    // Predicated region
    $region6: #{tpu_custom_call.1} parent=1 // pred_check
      _
    $region7: #{tpu_custom_call.1} parent=1 // pred_check_branch
      %23 = sbr.rel (0) target = $region9
    $region8: #{tpu_custom_call.1} parent=1 // pred_region
      %25 = vsyncadd [#allocation6], 0
      %s27 = sshll.u32 %s1, 4
      %s28 = int_to_ptr.hbm [resolvable:$true] %s27
      %s29 = sshll.u32 [#allocation5], 4
      %s30 = int_to_ptr.vmem [resolvable:$true] %s29
      %32 = dma.hbm_to_vmem [thread:$0]  %s28, 128, %s30, [#allocation6]
    $region9: #{tpu_custom_call.1} parent=1 // pred_fallthru
      _
    // Predicated region
    $region10: #{tpu_custom_call.1} parent=1 // pred_check
      _
    $region11: #{tpu_custom_call.1} parent=1 // pred_check_branch
      %34 = sbr.rel (0) target = $region13
    $region12: #{tpu_custom_call.1} parent=1 // pred_region
      _
    $region13: #{tpu_custom_call.1} parent=1 // pred_fallthru
      _
    // Predicated region
    $region14: #{tpu_custom_call.1} parent=1 // pred_check
      _
    $region15: #{tpu_custom_call.1} parent=1 // pred_check_branch
      %36 = sbr.rel (0) target = $region17
    $region16: #{tpu_custom_call.1} parent=1 // pred_region
      %38 = dma.done [#allocation3], 128
    $region17: #{tpu_custom_call.1} parent=1 // pred_fallthru
      _
    // Predicated region
    $region18: #{tpu_custom_call.1} parent=1 // pred_check
      _
    $region19: #{tpu_custom_call.1} parent=1 // pred_check_branch
      %40 = sbr.rel (0) target = $region21
    $region20: #{tpu_custom_call.1} parent=1 // pred_region
      %42 = dma.done [#allocation6], 128
    $region21: #{tpu_custom_call.1} parent=1 // pred_fallthru
      _
    %v43 = vld [vmem:[#allocation2] sm:$0xff]
    %v44 = vld [vmem:[#allocation5] sm:$0x1f]
    %v45 = vld [vmem:[%s2] sm:$0x1]
    %v47 = vperm.slane %v45, 0
    %vm49 = vcmask 523264
    %v51 = vsel %vm49, %v43, 0
    %v54 = vsel %vm49, %v44, 0
    %56 = vmatpush.xpose.msra.mxu0 0.0
    %57 = vmatpush.xpose.msra.mxu0 0.0
    %58 = vmatpush.xpose.msra.mxu0 0.0
    %59 = vmatpush.xpose.msra.mxu0 0.0
    %60 = vmatpush.xpose.msra.mxu0 0.0
    %61 = vmatpush.xpose.msra.mxu0 0.0
    %62 = vmatpush.xpose.msra.mxu0 0.0
    %63 = vmatpush.xpose.msra.mxu0 0.0
    %64 = vmatpush.xpose.msra.mxu0 0.0
    %65 = vmatpush.xpose.msra.mxu0 0.0
    %66 = vmatpush.xpose.msra.mxu0 0.0
    %67 = vmatpush.xpose.msra.mxu0 0.0
    %68 = vmatpush.xpose.msra.mxu0 0.0
    %69 = vmatpush.xpose.msra.mxu0 0.0
    %70 = vmatpush.xpose.msra.mxu0 0.0
    %71 = vmatpush.xpose.msra.mxu0 %v54
    %72 = vmatmul.f32.gmra.mxu0 %v51
    %v73 = vpop.f32.mrf.mxu0
    %v74 = vadd.f32 %v47, %v73
    %75 = vdwg.mxu0
    %vm76 = vcmask 39936
    %77 = vst.msk [vmem:[#allocation7] sm:$0xff] %vm76, %v74
    // Predicated region
    $region22: #{tpu_custom_call.1} parent=1 // pred_check
      _
    $region23: #{tpu_custom_call.1} parent=1 // pred_check_branch
      %79 = sbr.rel (0) target = $region25
    $region24: #{tpu_custom_call.1} parent=1 // pred_region
      %81 = vsyncadd [#allocation4], 0
      %s83 = sshll.u32 [#allocation7], 4
      %s84 = int_to_ptr.vmem [resolvable:$true] %s83
      %s85 = sshll.u32 %s3, 4
      %s86 = int_to_ptr.hbm [resolvable:$true] %s85
      %88 = dma.vmem_to_hbm [thread:$0]  %s84, 128, %s86, [#allocation4]
    $region25: #{tpu_custom_call.1} parent=1 // pred_fallthru
      _
    // Predicated region
    $region26: #{tpu_custom_call.1} parent=1 // pred_check
      _
    $region27: #{tpu_custom_call.1} parent=1 // pred_check_branch
      %90 = sbr.rel (0) target = $region29
    $region28: #{tpu_custom_call.1} parent=1 // pred_region
      %92 = dma.done [#allocation4], 128
    $region29: #{tpu_custom_call.1} parent=1 // pred_fallthru
      _
    %93 = vsyncpa [#allocation3], 1
    %94 = vsyncpa [#allocation6], 1
    %95 = vsyncpa [#allocation4], 1

</llo_original>
